<compile_context>
chip_gen: v7x
topology: tpu7x:2x2x1
jax: 0.10.0
libtpu: 0.0.40
codegen_flags: <defaults>
</compile_context>

<pallas_src>
import functools

import jax
import jax.numpy as jnp
from jax import lax
from jax.experimental import pallas as pl
from jax.experimental.pallas import tpu as pltpu

_BIG = 1e30  # additive penalty / "no target" sentinel (dominates any real dist^2)


def _row_min_dy2_kernel(tgt_ref, d1_ref, *, H, W):
    """Pass 1 of the separable squared-EDT (per batch element).

    d1[yi, x] = min over rows yj with target(yj, x) != 0 of (yj - yi)^2
                (>= BIG if column x has no foreground pixel).
    Layout: yi on sublanes, x on lanes (lane-dense).
    """
    yi = lax.broadcasted_iota(jnp.int32, (H, 1), 0).astype(jnp.float32)   # (H, 1)
    d1_ref[...] = jnp.full((H, W), _BIG, dtype=jnp.float32)

    def body(yj, carry):
        trow = tgt_ref[pl.ds(yj, 1), :]                                   # (1, W)
        pen = (trow == 0.0).astype(jnp.float32) * jnp.float32(_BIG)       # (1, W)
        dy = yi - yj.astype(jnp.float32)                                  # (H, 1)
        d1_ref[...] = jnp.minimum(d1_ref[...], dy * dy + pen)             # (H, W)
        return carry

    lax.fori_loop(0, H, body, 0)


def _col_min_and_loss_kernel(d1t_ref, logits_t_ref, tgt_t_ref, o_ref, mind2_ref,
                             *, H, W):
    """Pass 2 + loss (per batch element). Everything lives in (x, y) layout.

    mind2[xi, yi] = min over x of (d1t[x, yi] + (x - xi)^2)
    """
    xi = lax.broadcasted_iota(jnp.int32, (W, 1), 0).astype(jnp.float32)   # (W, 1)
    mind2_ref[...] = jnp.full((W, H), _BIG, dtype=jnp.float32)

    def body(x, carry):
        d1row = d1t_ref[pl.ds(x, 1), :]                                   # (1, H)
        dx = xi - x.astype(jnp.float32)                                   # (W, 1)
        mind2_ref[...] = jnp.minimum(mind2_ref[...], dx * dx + d1row)     # (W, H)
        return carry

    lax.fori_loop(0, W, body, 0)

    preds = jax.nn.sigmoid(logits_t_ref[...].astype(jnp.float32))         # (W, H)
    mask = (tgt_t_ref[...] != 0.0).astype(jnp.float32)                    # (W, H)
    min_dist = jnp.sqrt(mind2_ref[...])                                   # (W, H)

    # hd1 = sum(pred * dist_to_nearest_target) / sum(pred)
    hd1 = jnp.sum(preds * min_dist) / jnp.sum(preds)
    # hd2 = sum(1 - pred[target]) / num_targets
    n_tgt = jnp.sum(mask)
    hd2 = (n_tgt - jnp.sum(preds * mask)) / n_tgt

    o_ref[...] = jnp.full((1, 1), hd1 + hd2, dtype=jnp.float32)


def hausdorff_distance_loss_pallas(logits, targets, crop=False, crop_margin=0,
                                   reduction=None):
    # TODO(synk): crop=True requires a data-dependent per-sample crop window
    # (dynamic shapes); only the default crop=False path is implemented.
    assert not crop, "crop=True path not supported in the Pallas kernel"

    B, H, W = logits.shape
    N = H * W
    logits_f = logits.astype(jnp.float32)
    tgt_f = targets.astype(jnp.float32)

    # Actual per-step VMEM footprint is ~O(N) (a handful of (H,W) f32 slabs,
    # double-buffered inputs + one scratch); set the scoped limit explicitly
    # with generous headroom, capped below every generation's physical VMEM.
    vmem_limit = int(min(64 * 1024 * 1024, max(16 * 1024 * 1024, 48 * N * 4)))
    cparams = pltpu.CompilerParams(dimension_semantics=("parallel",),
                                   vmem_limit_bytes=vmem_limit)

    # ---- Pass 1: vertical squared distance to the nearest target row, per column.
    d1 = pl.pallas_call(
        functools.partial(_row_min_dy2_kernel, H=H, W=W),
        out_shape=jax.ShapeDtypeStruct((B, H, W), jnp.float32),
        grid_spec=pltpu.PrefetchScalarGridSpec(
            num_scalar_prefetch=0,
            grid=(B,),
            in_specs=[pl.BlockSpec((None, H, W), lambda b: (b, 0, 0))],
            out_specs=pl.BlockSpec((None, H, W), lambda b: (b, 0, 0)),
        ),
        compiler_params=cparams,
    )(tgt_f)

    # Transposes done by XLA between the two kernels (lane-dense operands for
    # kernel B, no in-kernel relayouts). Intermediate is only B*N*4 bytes.
    d1_t = jnp.swapaxes(d1, 1, 2)            # (B, W, H)
    logits_t = jnp.swapaxes(logits_f, 1, 2)  # (B, W, H)
    tgt_t = jnp.swapaxes(tgt_f, 1, 2)        # (B, W, H)

    # ---- Pass 2: horizontal min-plus with (x - xi)^2, then the weighted sums.
    out = pl.pallas_call(
        functools.partial(_col_min_and_loss_kernel, H=H, W=W),
        out_shape=jax.ShapeDtypeStruct((B, 1, 1), jnp.float32),
        grid_spec=pltpu.PrefetchScalarGridSpec(
            num_scalar_prefetch=0,
            grid=(B,),
            in_specs=[
                pl.BlockSpec((None, W, H), lambda b: (b, 0, 0)),
                pl.BlockSpec((None, W, H), lambda b: (b, 0, 0)),
                pl.BlockSpec((None, W, H), lambda b: (b, 0, 0)),
            ],
            out_specs=pl.BlockSpec((None, 1, 1), lambda b: (b, 0, 0)),
            scratch_shapes=[pltpu.VMEM((W, H), jnp.float32)],
        ),
        compiler_params=cparams,
    )(d1_t, logits_t, tgt_t)

    losses = out[:, 0, 0]                    # (B,) per-sample Hausdorff loss
    if reduction == 'none':
        return losses
    elif reduction == 'sum':
        return jnp.sum(losses)
    else:                                    # module default (reduction=None) -> mean
        return jnp.mean(losses)


def hausdorff_distance_loss_ref(logits, targets, reduction=None):
    """Pure-JAX O(N^2) reference mirroring the intended torch semantics."""
    B, H, W = logits.shape
    preds = jax.nn.sigmoid(logits.astype(jnp.float32))
    ys, xs = jnp.meshgrid(jnp.arange(H), jnp.arange(W), indexing='ij')
    coords = jnp.stack([ys, xs], axis=-1).reshape(-1, 2).astype(jnp.float32)

    def per_batch(pred, tgt):
        mask = (tgt.reshape(-1) != 0)
        d = jnp.sqrt(jnp.sum((coords[:, None, :] - coords[None, :, :]) ** 2,
                             axis=-1))
        masked = jnp.where(mask[None, :], d, jnp.inf)
        min_dist = jnp.min(masked, axis=1)
        pf = pred.reshape(-1)
        mf = mask.astype(jnp.float32)
        hd1 = jnp.sum(pf * min_dist) / jnp.sum(pf)
        hd2 = jnp.sum((1.0 - pf) * mf) / jnp.sum(mf)
        return hd1 + hd2

    losses = jax.vmap(per_batch)(preds, targets)
    if reduction == 'none':
        return losses
    elif reduction == 'sum':
        return jnp.sum(losses)
    return jnp.mean(losses)


if __name__ == "__main__":
    key = jax.random.PRNGKey(0)
    k1, k2 = jax.random.split(key)
    B, H, W = 2, 16, 16
    logits = jax.random.normal(k1, (B, H, W), dtype=jnp.float32)
    targets = (jax.random.uniform(k2, (B, H, W)) < 0.2).astype(jnp.int32)
    # Guarantee at least one foreground pixel per image (the loss is undefined
    # otherwise, just like in the PyTorch version).
    targets = targets.at[:, H // 2, W // 2].set(1)

    loss = hausdorff_distance_loss_pallas(logits, targets)
    loss = jax.block_until_ready(loss)

    ref = hausdorff_distance_loss_ref(logits, targets)
    assert jnp.allclose(loss, ref, rtol=1e-4, atol=1e-4), (loss, ref)
    print("KERNEL_OK")
</pallas_src>

<mosaic_0001>
module attributes {stable_mosaic.version = 11 : i64} {
  func.func @_row_min_dy2_kernel(%arg0: i32, %arg1: memref<1x16x16xf32, #tpu.memory_space<vmem>>, %arg2: memref<1x16x16xf32, #tpu.memory_space<vmem>>) attributes {dimension_semantics = [#tpu.dimension_semantics<parallel>], iteration_bounds = array<i64: 2>, scalar_prefetch = 0 : i64, scratch_operands = 0 : i64, tpu.core_type = #tpu.core_type<tc>, window_params = [{transform_indices = @transform_0, window_bounds = array<i64: 1, 16, 16>}, {transform_indices = @transform_1, window_bounds = array<i64: 1, 16, 16>}]} {
    %0 = tpu.iota {dimensions = array<i32: 0>} : vector<16x1xi32>
    %1 = arith.sitofp %0 : vector<16x1xi32> to vector<16x1xf32>
    %cst = arith.constant 1.000000e+30 : f32
    %2 = vector.broadcast %cst : f32 to vector<16x16xf32>
    %c0 = arith.constant 0 : index
    %c0_0 = arith.constant 0 : index
    %c0_1 = arith.constant 0 : index
    %3 = vector.load %arg2[%c0, %c0_0, %c0_1] : memref<1x16x16xf32, #tpu.memory_space<vmem>>, vector<1x16x16xf32>
    %4 = vector.shape_cast %3 : vector<1x16x16xf32> to vector<16x16xf32>
    %5 = vector.shape_cast %2 : vector<16x16xf32> to vector<1x16x16xf32>
    tpu.vector_store %arg2[%c0, %c0_0, %c0_1], %5 {strides = array<i32>} : memref<1x16x16xf32, #tpu.memory_space<vmem>>, vector<1x16x16xf32>,
    %c0_i32 = arith.constant 0 : i32
    %c16_i32 = arith.constant 16 : i32
    %6 = arith.addi %c0_i32, %c16_i32 : i32
    %c1_i32 = arith.constant 1 : i32
    scf.for %arg3 = %c0_i32 to %6 step %c1_i32  : i32 {
      %c0_3 = arith.constant 0 : index
      %7 = arith.index_cast %arg3 : i32 to index
      %c0_4 = arith.constant 0 : index
      %8 = vector.load %arg1[%c0_3, %7, %c0_4] : memref<1x16x16xf32, #tpu.memory_space<vmem>>, vector<1x1x16xf32>
      %9 = vector.shape_cast %8 : vector<1x1x16xf32> to vector<1x16xf32>
      %cst_5 = arith.constant 0.000000e+00 : f32
      %10 = vector.broadcast %cst_5 : f32 to vector<1x16xf32>
      %11 = arith.cmpf oeq, %9, %10 : vector<1x16xf32>
      %12 = arith.extui %11 : vector<1x16xi1> to vector<1x16xi32>
      %13 = arith.sitofp %12 : vector<1x16xi32> to vector<1x16xf32>
      %cst_6 = arith.constant 1.000000e+30 : f32
      %14 = vector.broadcast %cst_6 : f32 to vector<1x16xf32>
      %15 = arith.mulf %13, %14 : vector<1x16xf32>
      %16 = arith.sitofp %arg3 : i32 to f32
      %17 = vector.broadcast %16 : f32 to vector<16x1xf32>
      %18 = arith.subf %1, %17 : vector<16x1xf32>
      %c0_7 = arith.constant 0 : index
      %c0_8 = arith.constant 0 : index
      %c0_9 = arith.constant 0 : index
      %19 = vector.load %arg2[%c0_7, %c0_8, %c0_9] : memref<1x16x16xf32, #tpu.memory_space<vmem>>, vector<1x16x16xf32>
      %20 = vector.shape_cast %19 : vector<1x16x16xf32> to vector<16x16xf32>
      %21 = arith.mulf %18, %18 : vector<16x1xf32>
      %22 = vector.broadcast %21 : vector<16x1xf32> to vector<16x16xf32>
      %23 = vector.broadcast %15 : vector<1x16xf32> to vector<16x16xf32>
      %24 = arith.addf %22, %23 : vector<16x16xf32>
      %25 = arith.minimumf %20, %24 : vector<16x16xf32>
      %c0_10 = arith.constant 0 : index
      %c0_11 = arith.constant 0 : index
      %c0_12 = arith.constant 0 : index
      %26 = vector.load %arg2[%c0_10, %c0_11, %c0_12] : memref<1x16x16xf32, #tpu.memory_space<vmem>>, vector<1x16x16xf32>
      %27 = vector.shape_cast %26 : vector<1x16x16xf32> to vector<16x16xf32>
      %28 = vector.shape_cast %25 : vector<16x16xf32> to vector<1x16x16xf32>
      tpu.vector_store %arg2[%c0_10, %c0_11, %c0_12], %28 {strides = array<i32>} : memref<1x16x16xf32, #tpu.memory_space<vmem>>, vector<1x16x16xf32>,
    }
    %c16_i32_2 = arith.constant 16 : i32
    return
  }
  func.func @transform_0(%arg0: i32) -> (i32, i32, i32) {
    %c0_i32 = arith.constant 0 : i32
    %c0_i32_0 = arith.constant 0 : i32
    %c0_i32_1 = arith.constant 0 : i32
    return %arg0, %c0_i32, %c0_i32_0 : i32, i32, i32
  }
  func.func @transform_1(%arg0: i32) -> (i32, i32, i32) {
    %c0_i32 = arith.constant 0 : i32
    %c0_i32_0 = arith.constant 0 : i32
    %c0_i32_1 = arith.constant 0 : i32
    return %arg0, %c0_i32, %c0_i32_0 : i32, i32, i32
  }
}

</mosaic_0001>

<llo_original>
// kernel: tpu_custom_call.1
$region0: #{tpu_custom_call.1}
  #allocation0 [shape = 'u32[]', space=smem, size = 0x4, offset = 0x4, fixed_abs, tag = 'smem constant byte address 0x4 - core index']
  #allocation1 [shape = 'u32[144,128]{1,0:T(1,128)}', space=vmem, size = 0x12000, scoped, tag = 'internal scratch']
  %s0 = inlined_call_operand.hbm [shape: f32[2,16,16], index: 0, kind: input, shape index: {}]
  %s1 = inlined_call_operand.hbm [shape: f32[2,16,16], index: 1, kind: output, shape index: {}]
  %s2 = sld [smem:[#allocation0]]
  $region48: #{tpu_custom_call.1} parent=0
    _
  %s4 = ssub.s32 1, %s2
  %s5 = scalar_select 0, %s4, %s2
  $region1: #{tpu_custom_call.1} parent=0
    #allocation2 [shape = 'u8[16384]{0}', space=vmem, size = 0x4000, scoped, tag = 'input window, operand 0']
    #allocation3 [shape = 's32[2]{0}', space=sflag, size = 0x8, scoped, tag = 'scoped memory for tpu_custom_call.1']
    #allocation4 [shape = 's32[2]{0}', space=sflag, size = 0x8, scoped, tag = 'scoped memory for tpu_custom_call.1']
    #allocation5 [shape = 'u8[16384]{0}', space=vmem, size = 0x4000, scoped, tag = 'output window, operand 0']
    %6 = vsyncpa [#allocation3], 0
    %s7 = scalar_lea.sflag [#allocation3], 1
    %8 = vsyncpa %s7, 0
    %9 = vsyncpa [#allocation4], 0
    %s10 = scalar_lea.sflag [#allocation4], 1
    %11 = vsyncpa %s10, 0
    loop: start=0, step=1, limit=4
    $region2: #{tpu_custom_call.1} parent=1 // loop_pre_header
      _
    $region3: #{tpu_custom_call.1} parent=1 // loop_header
      %s13 = sphi 0, %s17
      %p14 = scmp.ge.s32.totalorder %s13, 4
      %s23 = sphi 0, %s25
      %s26 = sphi 0, %s23
      %s27 = sphi 0, %s26
      %s43 = sphi 0, %s27
      %s49 = sphi 0, %s51
      %s52 = sphi 0, %s49
      %s53 = sphi 0, %s52
      %s69 = sphi 0, %s53
    $region4: #{tpu_custom_call.1} parent=1 // loop_header_branch
      %16 = sbr.rel (%p14) target = $region8
    $region5: #{tpu_custom_call.1} parent=1 // loop_body
      %s18 = ssub.s32 %s13, 1
      %s19 = ssub.s32 %s13, 2
      %s20 = sadd.s32 %s13, 1
      %s21 = ssub.s32 %s13, %s20
      %p22 = scmp.eq.s32.totalorder %s21, 0
      %s24 = sadd.s32 %s23, 1
      %s25 = scalar_select %p22, %s23, %s24
      %p28 = pneg %p22
      %p29 = scmp.eq.s32.totalorder %s13, 1
      %p30 = por %p28, %p29
      %p31 = scmp.ne.s32.totalorder %s23, %s26
      %p32 = scmp.eq.s32.totalorder %s13, 0
      %p33 = por %p31, %p32
      %p34 = scmp.ne.s32.totalorder %s23, %s26
      %p35 = scmp.eq.s32.totalorder %s18, 1
      %p36 = por %p34, %p35
      %p37 = scmp.ne.s32.totalorder %s26, %s27
      %p38 = scmp.eq.s32.totalorder %s18, 0
      %p39 = por %p37, %p38
      %p40 = scmp.ne.s32.totalorder %s26, %s27
      %p41 = scmp.eq.s32.totalorder %s19, 1
      %p42 = por %p40, %p41
      %p44 = scmp.ne.s32.totalorder %s27, %s43
      %p45 = scmp.eq.s32.totalorder %s19, 0
      %p46 = por %p44, %p45
      %s47 = ssub.s32 %s13, %s20
      %p48 = scmp.eq.s32.totalorder %s47, 0
      %s50 = sadd.s32 %s49, 1
      %s51 = scalar_select %p48, %s49, %s50
      %p54 = pneg %p48
      %p55 = scmp.eq.s32.totalorder %s13, 1
      %p56 = por %p54, %p55
      %p57 = scmp.ne.s32.totalorder %s49, %s52
      %p58 = scmp.eq.s32.totalorder %s13, 0
      %p59 = por %p57, %p58
      %p60 = scmp.ne.s32.totalorder %s49, %s52
      %p61 = scmp.eq.s32.totalorder %s18, 1
      %p62 = por %p60, %p61
      %p63 = scmp.ne.s32.totalorder %s52, %s53
      %p64 = scmp.eq.s32.totalorder %s18, 0
      %p65 = por %p63, %p64
      %p66 = scmp.ne.s32.totalorder %s52, %s53
      %p67 = scmp.eq.s32.totalorder %s19, 1
      %p68 = por %p66, %p67
      %p70 = scmp.ne.s32.totalorder %s53, %s69
      %p71 = scmp.eq.s32.totalorder %s19, 0
      %p72 = por %p70, %p71
      %p73 = scmp.le.s32.totalorder 1, %s13
      %p74 = scmp.lt.s32.totalorder %s13, 3
      %p75 = pnand %p73, %p74
      %p76 = pneg %p75
      // Predicated region
      $region9: #{tpu_custom_call.1} parent=5 // pred_check
        _
      $region10: #{tpu_custom_call.1} parent=5 // pred_check_branch
        %78 = sbr.rel (%p75) target = $region12
      $region11: #{tpu_custom_call.1} parent=5 // pred_region
        %s79 = ssub.s32 %s13, 1
      $region12: #{tpu_custom_call.1} parent=5 // pred_fallthru
        _
      %p80 = scmp.lt.s32.totalorder %s13, 2
      // Predicated region
      $region13: #{tpu_custom_call.1} parent=5 // pred_check
        %p81 = pneg %p80
      $region14: #{tpu_custom_call.1} parent=5 // pred_check_branch
        %83 = sbr.rel (%p81) target = $region16
      $region15: #{tpu_custom_call.1} parent=5 // pred_region
        // Predicated region
        $region17: #{tpu_custom_call.1} parent=15 // pred_check
          %p84 = pneg %p33
        $region18: #{tpu_custom_call.1} parent=15 // pred_check_branch
          %86 = sbr.rel (%p84) target = $region20
        $region19: #{tpu_custom_call.1} parent=15 // pred_region
          %s87 = sand.u32 %s23, 1
          %s88 = scalar_lea.sflag [#allocation3], %s87
          %s89 = sand.u32 %s23, 1
          %s90 = smul.addr %s89, 16
          %s91 = scalar_lea.vmem [#allocation2], %s90
          %s93 = ssub.s32 256, 256
          %94 = vsyncadd %s88, %s93
          %s95 = smul.addr %s13, 2
          %s96 = smul.addr %s95, 128
          %s97 = scalar_lea.hbm %s0, %s96
          %s98 = sshll.u32 %s91, 4
          %s99 = int_to_ptr.vmem [resolvable:$true] %s98
          %104 = dma.hbm_to_vmem [thread:$0]  %s97, 256, %s99, %s88, 128, 128, 8
        $region20: #{tpu_custom_call.1} parent=15 // pred_fallthru
          _
      $region16: #{tpu_custom_call.1} parent=5 // pred_fallthru
        _
      %p105 = scmp.le.s32.totalorder 1, %s13
      %p106 = scmp.lt.s32.totalorder %s13, 3
      %p107 = pnand %p105, %p106
      %p108 = pneg %p107
      // Predicated region
      $region21: #{tpu_custom_call.1} parent=5 // pred_check
        _
      $region22: #{tpu_custom_call.1} parent=5 // pred_check_branch
        %110 = sbr.rel (%p107) target = $region24
      $region23: #{tpu_custom_call.1} parent=5 // pred_region
        %s111 = ssub.s32 %s13, 1
        %s112 = sand.u32 %s26, 1
        %s113 = scalar_lea.sflag [#allocation3], %s112
        %s114 = sand.u32 %s26, 1
        %s115 = smul.addr %s114, 16
        %s116 = scalar_lea.vmem [#allocation2], %s115
        // Predicated region
        $region25: #{tpu_custom_call.1} parent=23 // pred_check
          %p117 = pneg %p39
        $region26: #{tpu_custom_call.1} parent=23 // pred_check_branch
          %119 = sbr.rel (%p117) target = $region28
        $region27: #{tpu_custom_call.1} parent=23 // pred_region
          %120 = dma.done %s113, 256
        $region28: #{tpu_custom_call.1} parent=23 // pred_fallthru
          _
        %s121 = sand.u32 %s26, 1
        %s122 = scalar_lea.sflag [#allocation3], %s121
        %s123 = sand.u32 %s26, 1
        %s124 = smul.addr %s123, 16
        %s125 = scalar_lea.vmem [#allocation2], %s124
        %p126 = pneg %p39
        %p127 = pneg %p36
        %p128 = pneg %p65
        %p129 = pneg %p62
        %s130 = sand.u32 %s52, 1
        %s131 = scalar_lea.sflag [#allocation4], %s130
        %s132 = sand.u32 %s52, 1
        %s133 = smul.addr %s132, 16
        %s134 = scalar_lea.vmem [#allocation5], %s133
        %v135 = vlaneseq
        %v136 = vshrl.u32 %v135, 7
        %v137 = vadd.s32 %v136, 8
        %v138 = vcvt.s32.f32 %v136
        %v139 = vcvt.s32.f32 %v137
        %vm140 = vcmask 130048
        %141 = vst.msk [vmem:[%s134] sm:$0xff] %vm140, 1e+30
        %142 = vst.msk [vmem:[%s134 + $0x8] sm:$0xff] %vm140, 1e+30
        loop: start=0, step=1, limit=16
        $region29: #{tpu_custom_call.1} parent=23 // loop_pre_header
          _
        $region30: #{tpu_custom_call.1} parent=23 // loop_header
          %s144 = sphi 0, %s148
          %p145 = scmp.ge.s32.totalorder %s144, 16
        $region31: #{tpu_custom_call.1} parent=23 // loop_header_branch
          %147 = sbr.rel (%p145) target = $region35
        $region32: #{tpu_custom_call.1} parent=23 // loop_body
          %s149 = scalar_lea.vmem %s116, %s144 [#allocation2]
          %v150 = vld [vmem:[%s149] sm:$0x1]
          %vm151 = vcmp.eq.f32.partialorder %v150, 0.0
          %v152 = vsel %vm151, 1, 0
          %v153 = vcvt.s32.f32 %v152
          %v154 = vmul.f32 %v153, 1e+30
          %s155 = scvt.s32.f32 %s144
          %v156 = vstv %s155
          %v157 = vsub.f32 %v138, %v156
          %v158 = vsub.f32 %v139, %v156
          %v159 = vld [vmem:[%s134] sm:$0xff]
          %v160 = vld [vmem:[%s134 + $0x8] sm:$0xff]
          %v161 = vmul.f32 %v157, %v157
          %v162 = vmul.f32 %v158, %v158
          %v163 = vlaneseq
          %v164 = vshrl.u32 %v163, 7
          %v165 = vsub.s32 0, %v164
          %v166 = vrot.slane %v154, %v165
          %v167 = vadd.f32 %v161, %v166
          %v168 = vadd.f32 %v162, %v166
          %v169 = vmin.f32 %v159, %v167
          %v170 = vmin.f32 %v160, %v168
          %171 = vst.msk [vmem:[%s134] sm:$0xff] %vm140, %v169
          %172 = vst.msk [vmem:[%s134 + $0x8] sm:$0xff] %vm140, %v170
        $region33: #{tpu_custom_call.1} parent=23 // loop_footer
          %s148 = sadd.s32 1, %s144
        $region34: #{tpu_custom_call.1} parent=23 // loop_footer_branch
          %143 = sbr.rel target = $region30
        $region35: #{tpu_custom_call.1} parent=23 // loop_exit
          _
        %s173 = sand.u32 %s52, 1
        %s174 = scalar_lea.sflag [#allocation4], %s173
        %s175 = sand.u32 %s52, 1
        %s176 = smul.addr %s175, 16
        %s177 = scalar_lea.vmem [#allocation5], %s176
        // Predicated region
        $region36: #{tpu_custom_call.1} parent=23 // pred_check
          %p178 = pneg %p62
        $region37: #{tpu_custom_call.1} parent=23 // pred_check_branch
          %180 = sbr.rel (%p178) target = $region39
        $region38: #{tpu_custom_call.1} parent=23 // pred_region
          %s182 = ssub.s32 256, 256
          %183 = vsyncadd %s174, %s182
          %s184 = smul.addr %s18, 2
          %s185 = smul.addr %s184, 128
          %s186 = scalar_lea.hbm %s1, %s185
          %s187 = sshll.u32 %s177, 4
          %s188 = int_to_ptr.vmem [resolvable:$true] %s187
          %193 = dma.vmem_to_hbm [thread:$0]  %s188, 256, %s186, %s174, 128, 128, 8
        $region39: #{tpu_custom_call.1} parent=23 // pred_fallthru
          _
      $region24: #{tpu_custom_call.1} parent=5 // pred_fallthru
        _
      %p194 = scmp.le.s32.totalorder 2, %s13
      // Predicated region
      $region40: #{tpu_custom_call.1} parent=5 // pred_check
        %p195 = pneg %p194
      $region41: #{tpu_custom_call.1} parent=5 // pred_check_branch
        %197 = sbr.rel (%p195) target = $region43
      $region42: #{tpu_custom_call.1} parent=5 // pred_region
        %s198 = ssub.s32 %s13, 2
        // Predicated region
        $region44: #{tpu_custom_call.1} parent=42 // pred_check
          %p199 = pneg %p68
        $region45: #{tpu_custom_call.1} parent=42 // pred_check_branch
          %201 = sbr.rel (%p199) target = $region47
        $region46: #{tpu_custom_call.1} parent=42 // pred_region
          %s202 = sand.u32 %s53, 1
          %s203 = scalar_lea.sflag [#allocation4], %s202
          %s204 = sand.u32 %s53, 1
          %s205 = smul.addr %s204, 16
          %s206 = scalar_lea.vmem [#allocation5], %s205
          %207 = dma.done %s203, 256
        $region47: #{tpu_custom_call.1} parent=42 // pred_fallthru
          _
      $region43: #{tpu_custom_call.1} parent=5 // pred_fallthru
        _
    $region6: #{tpu_custom_call.1} parent=1 // loop_footer
      %s17 = sadd.s32 1, %s13
    $region7: #{tpu_custom_call.1} parent=1 // loop_footer_branch
      %12 = sbr.rel target = $region3
    $region8: #{tpu_custom_call.1} parent=1 // loop_exit
      _
    %208 = vsyncpa [#allocation3], 1
    %s209 = scalar_lea.sflag [#allocation3], 1
    %210 = vsyncpa %s209, 1
    %211 = vsyncpa [#allocation4], 1
    %s212 = scalar_lea.sflag [#allocation4], 1
    %213 = vsyncpa %s212, 1

</llo_original>
